<compile_context>
chip_gen: v7x
topology: tpu7x:2x2x1
jax: 0.10.0
libtpu: 0.0.40
codegen_flags: <defaults>
</compile_context>

<pallas_src>
import functools
import math

import jax
import jax.numpy as jnp
from jax.experimental import pallas as pl
from jax.experimental.pallas import tpu as pltpu


def _round_up(v, m):
    return ((v + m - 1) // m) * m


# --------------------------------------------------------------------------
# Kernels (all parameters baked in as compile-time constants)
# --------------------------------------------------------------------------
def _linear_quantizer_kernel(x_ref, o_ref, *, t_scale, t_off, step, mid_off,
                             n_edges, first_val, last_val):
    # x_ref / o_ref: (block_rows, cols) tiles in VMEM, original dtype.
    x = x_ref[...].astype(jnp.float32)
    k = float(n_edges)                              # number of bin edges = n_bins - 2
    t = x * t_scale + t_off                         # fractional edge index
    idx = jnp.clip(jnp.ceil(t), 0.0, k)             # = #{j : start + j*step < x}
    mid = mid_off + idx * step                      # midpoint of bucket idx
    # lookup_bins[idx]: interior entries are midpoints; the two end entries
    # clamp to bins[0]/bins[-1].  Interior midpoints lie strictly inside
    # [start, stop], so a clip is equivalent to the nested select.
    o_ref[...] = jnp.clip(mid, first_val, last_val).astype(o_ref.dtype)


def _log_quantizer_kernel(x_ref, o_ref, *, log_scale, log_off, exp_scale,
                          exp_off, interior_coeff, n_edges, first_val,
                          last_val, eps):
    x = x_ref[...].astype(jnp.float32)
    k = float(n_edges)
    xe = x + eps                                    # module adds eps before bucketize
    # t = (log_base(xe) - lo) / dstep ; non-positive inputs are clamped so they
    # land in bucket 0 (bins are strictly positive), and OOB-masked garbage in
    # a partial last block cannot produce Inf (NaN is fine, its write is masked).
    t = jnp.log(jnp.maximum(xe, 1e-30)) * log_scale + log_off
    idx = jnp.clip(jnp.ceil(t), 0.0, k)
    # interior lookup value: 0.5*(bins[idx-1] + bins[idx])
    #                      = base**(lo + (idx-1)*dstep) * 0.5*(1 + base**dstep)
    # TODO(synk): if v7x profiling shows the single EUP slot saturated, replace
    # this exp with square-and-multiply of base**dstep driven by the <=6-bit idx.
    p = jnp.exp(exp_off + idx * exp_scale)
    mid = p * interior_coeff
    o_ref[...] = (jnp.clip(mid, first_val, last_val) - eps).astype(o_ref.dtype)


# --------------------------------------------------------------------------
# Per-generation tuning
# --------------------------------------------------------------------------
def _tpu_tuning():
    """Returns (tile_bytes_per_buffer, vmem_limit_bytes, num_tensorcores)."""
    kind = ""
    try:
        kind = jax.devices()[0].device_kind.lower()
    except Exception:
        pass
    if "v7" in kind:
        # ~3.2 TB/s HBM: amortize the ~0.35us per-grid-step overhead with big
        # tiles; in+out double-buffered => live ~ 4x tile, cap below 64 MiB VMEM.
        tile_bytes, vmem_limit, cores = 8 << 20, 48 << 20, 2
    elif "v6" in kind:
        tile_bytes, vmem_limit, cores = 4 << 20, 32 << 20, 1
    else:                       # v5e and unknown: HBM slow enough that 2 MiB is fine
        tile_bytes, vmem_limit, cores = 2 << 20, 32 << 20, 1
    try:
        vmem_cap = int(pltpu.get_tpu_info().vmem_capacity_bytes)
        vmem_limit = min(vmem_limit, (vmem_cap * 3) // 4)
    except Exception:
        pass
    return tile_bytes, vmem_limit, cores


# --------------------------------------------------------------------------
# Wrapper
# --------------------------------------------------------------------------
def quantizer_forward(x, *, start, stop, n_bins=64, logspace=False, base=10.0,
                      eps=1e-4, tile_bytes=None, donate_input=False):
    """Pallas implementation of Quantizer.forward(x)."""
    assert n_bins >= 4, "need at least 2 bin edges"
    assert float(stop) > float(start), "expects stop > start"
    orig_shape = x.shape
    dtype = x.dtype
    total = int(x.size)
    if total == 0:
        return x
    k = n_bins - 2  # number of bin edges

    # ---- closed-form constants, baked into the kernel (no SMEM operands) ----
    if logspace:
        assert base > 1.0
        ln_base = math.log(base)
        lo = math.log(start + eps) / ln_base
        hi = math.log(stop + eps) / ln_base
        dstep = (hi - lo) / (k - 1)
        kernel = functools.partial(
            _log_quantizer_kernel,
            log_scale=1.0 / (ln_base * dstep), log_off=-lo / dstep,
            exp_scale=dstep * ln_base, exp_off=(lo - dstep) * ln_base,
            interior_coeff=0.5 * (1.0 + base ** dstep), n_edges=k,
            first_val=base ** lo, last_val=base ** hi, eps=float(eps))
    else:
        step = (float(stop) - float(start)) / (k - 1)
        kernel = functools.partial(
            _linear_quantizer_kernel,
            t_scale=1.0 / step, t_off=-float(start) / step, step=step,
            mid_off=float(start) - 0.5 * step, n_edges=k,
            first_val=float(start), last_val=float(stop))

    itemsize = jnp.dtype(dtype).itemsize
    sublane = max(8, 32 // max(itemsize, 1))        # 8 f32, 16 bf16, 32 int8

    auto_tile_bytes, vmem_limit, num_cores = _tpu_tuning()
    if tile_bytes is None:
        tile_bytes = auto_tile_bytes

    # ---- lane-dense 2-D layout with no pad / slice on the common path ----
    cols = None
    for c in (1024, 512, 256, 128):
        if total % c == 0:
            cols = c
            break

    xf = x.reshape(-1)
    padded_total = total
    if cols is None:
        # Ragged size (not a multiple of 128): pad fallback (one extra HBM pass
        # each way — only fires for odd tensor sizes).
        cols = 128
        padded_total = _round_up(total, cols)
        xf = jnp.pad(xf, (0, padded_total - total))
    rows = padded_total // cols
    x2d = xf.reshape(rows, cols)

    # ---- block rows: target tile_bytes/buffer; partial last block is masked ----
    target_brows = max(sublane,
                       (tile_bytes // (cols * itemsize)) // sublane * sublane)
    nblk = pl.cdiv(rows, target_brows)
    if num_cores > 1 and rows >= num_cores * sublane:
        # keep both v7x TensorCores busy with balanced work
        nblk = max(nblk, num_cores)
        if nblk % num_cores:
            nblk = _round_up(nblk, num_cores)
    if nblk <= 1:
        brows = rows                                # single full-extent block
    else:
        brows = _round_up(pl.cdiv(rows, nblk), sublane)
    grid_len = pl.cdiv(rows, brows)

    call_kwargs = {}
    if donate_input and padded_total == total:
        # Same shape/dtype in and out: let XLA reuse the input buffer.  Only
        # enable when the caller no longer needs x (otherwise XLA inserts a copy).
        call_kwargs["input_output_aliases"] = {0: 0}

    out2d = pl.pallas_call(
        kernel,
        out_shape=jax.ShapeDtypeStruct((rows, cols), dtype),
        grid=(grid_len,),
        in_specs=[pl.BlockSpec((brows, cols), lambda i: (i, 0))],
        out_specs=pl.BlockSpec((brows, cols), lambda i: (i, 0)),
        compiler_params=pltpu.CompilerParams(
            dimension_semantics=("parallel",),
            vmem_limit_bytes=vmem_limit,
        ),
        **call_kwargs,
    )(x2d)

    out = out2d.reshape(-1)
    if padded_total != total:
        out = out[:total]
    return out.reshape(orig_shape)


# --------------------------------------------------------------------------
# Reference (faithful bucketize + gather) and test helpers
# --------------------------------------------------------------------------
def make_quantizer_params(start, stop, n_bins=64, logspace=False, base=10.0,
                          eps=1e-4):
    """Reproduces the module's registered buffers (float32)."""
    k = n_bins - 2
    if logspace:
        lo = math.log(start + eps) / math.log(base)
        hi = math.log(stop + eps) / math.log(base)
        bins = jnp.logspace(lo, hi, k, base=base, dtype=jnp.float32)
    else:
        bins = jnp.linspace(start, stop, k, dtype=jnp.float32)
    lookup_bins = jnp.concatenate(
        [bins[:1], 0.5 * bins[:-1] + 0.5 * bins[1:], bins[-1:]]
    ).astype(jnp.float32)
    return bins, lookup_bins


def _reference_forward(x, bins, lookup_bins, logspace=False, eps=1e-4):
    xf = x.astype(jnp.float32)
    if logspace:
        xf = xf + eps
    # torch.bucketize(right=False) == count of boundaries strictly less than x
    ids = jnp.sum(xf[..., None] > bins, axis=-1)
    out = lookup_bins[ids]
    if logspace:
        out = out - eps
    return out.astype(x.dtype)


def _check(name, x, y, y_ref, bins, *, logspace, eps):
    xf = x.astype(jnp.float32)
    xe = xf + eps if logspace else xf
    yf = y.astype(jnp.float32)
    rf = y_ref.astype(jnp.float32)
    err = jnp.abs(yf - rf)
    same_bucket_tol = 1e-5 + 1e-4 * jnp.abs(rf)
    mismatch = err > same_bucket_tol
    # Only elements lying (numerically) on a bin edge may pick the adjacent
    # bucket (closed-form fp rounding vs. the explicit bins array).
    near_edge = jnp.any(
        jnp.abs(xe[..., None] - bins) <= (1e-6 + 1e-4 * jnp.abs(bins)), axis=-1)
    assert bool(jnp.all(jnp.logical_or(~mismatch, near_edge))), (
        f"{name}: kernel disagrees with reference away from a bin edge")
    n_mismatch = int(jnp.sum(mismatch))
    assert n_mismatch <= max(4, int(2e-3 * x.size)), (
        f"{name}: too many bin-edge disagreements ({n_mismatch})")
    max_gap = float(jnp.max(bins[1:] - bins[:-1]))
    assert float(jnp.max(err)) <= max_gap * 1.01 + 1e-5, (
        f"{name}: error larger than one bucket")


if __name__ == "__main__":
    key = jax.random.PRNGKey(0)
    x_shape = (2, 4, 16, 16)              # small signal tensor (B, C, H, W)
    k_lin, k_log, k_blk, k_rag, k_bf16 = jax.random.split(key, 5)

    # --- linear quantizer: Quantizer(start=0.0, stop=1.0, n_bins=64) ---
    start, stop, n_bins = 0.0, 1.0, 64
    x = jax.random.uniform(k_lin, x_shape, dtype=jnp.float32,
                           minval=-0.1, maxval=1.1)
    y = jax.block_until_ready(
        quantizer_forward(x, start=start, stop=stop, n_bins=n_bins,
                          logspace=False))
    assert y.shape == x.shape and y.dtype == x.dtype
    bins, lut = make_quantizer_params(start, stop, n_bins, logspace=False)
    y_ref = _reference_forward(x, bins, lut, logspace=False)
    _check("linear", x, y, y_ref, bins, logspace=False, eps=1e-4)

    # --- logspace quantizer: Quantizer(1e-3, 10.0, n_bins=64, logspace=True) ---
    startl, stopl, eps, base = 1e-3, 10.0, 1e-4, 10.0
    xl = jax.random.uniform(k_log, x_shape, dtype=jnp.float32,
                            minval=0.0, maxval=10.0)
    yl = jax.block_until_ready(
        quantizer_forward(xl, start=startl, stop=stopl, n_bins=n_bins,
                          logspace=True, base=base, eps=eps))
    assert yl.shape == xl.shape and yl.dtype == xl.dtype
    binsl, lutl = make_quantizer_params(startl, stopl, n_bins, logspace=True,
                                        base=base, eps=eps)
    yl_ref = _reference_forward(xl, binsl, lutl, logspace=True, eps=eps)
    _check("logspace", xl, yl, yl_ref, binsl, logspace=True, eps=eps)

    # --- partial-last-block path (no pad; rows % brows != 0, masked writes) ---
    xb = jax.random.uniform(k_blk, (5, 3, 8, 64), dtype=jnp.float32,
                            minval=-0.1, maxval=1.1)     # 7680 = 15 * 512
    yb = jax.block_until_ready(
        quantizer_forward(xb, start=start, stop=stop, n_bins=n_bins,
                          logspace=False, tile_bytes=16 * 1024))
    yb_ref = _reference_forward(xb, bins, lut, logspace=False)
    _check("partial-block", xb, yb, yb_ref, bins, logspace=False, eps=1e-4)

    # --- ragged size (pad fallback, size % 128 != 0) ---
    xr = jax.random.uniform(k_rag, (2, 3, 5, 7), dtype=jnp.float32,
                            minval=-0.1, maxval=1.1)     # 210 elements
    yr = jax.block_until_ready(
        quantizer_forward(xr, start=start, stop=stop, n_bins=n_bins,
                          logspace=False))
    yr_ref = _reference_forward(xr, bins, lut, logspace=False)
    _check("ragged", xr, yr, yr_ref, bins, logspace=False, eps=1e-4)

    # --- bf16 I/O smoke test (halves HBM traffic; math still f32 in vregs) ---
    xh = jax.random.uniform(k_bf16, x_shape, dtype=jnp.float32,
                            minval=-0.1, maxval=1.1).astype(jnp.bfloat16)
    yh = jax.block_until_ready(
        quantizer_forward(xh, start=start, stop=stop, n_bins=n_bins,
                          logspace=False))
    assert yh.shape == xh.shape and yh.dtype == jnp.bfloat16
    yh_ref = _reference_forward(xh.astype(jnp.float32), bins, lut,
                                logspace=False)
    max_gap = float(jnp.max(bins[1:] - bins[:-1]))
    assert float(jnp.max(jnp.abs(yh.astype(jnp.float32) - yh_ref))) <= (
        max_gap * 1.1 + 0.01), "bf16: error larger than one bucket"

    print("KERNEL_OK")
</pallas_src>

<mosaic_0001>
module attributes {stable_mosaic.version = 11 : i64} {
  func.func @_linear_quantizer_kernel(%arg0: i32, %arg1: memref<2x1024xf32, #tpu.memory_space<vmem>>, %arg2: memref<2x1024xf32, #tpu.memory_space<vmem>>) attributes {dimension_semantics = [#tpu.dimension_semantics<parallel>], iteration_bounds = array<i64: 1>, scalar_prefetch = 0 : i64, scratch_operands = 0 : i64, tpu.core_type = #tpu.core_type<tc>, window_params = [{transform_indices = @transform_0, window_bounds = array<i64: 2, 1024>}, {transform_indices = @transform_1, window_bounds = array<i64: 2, 1024>}]} {
    %c0 = arith.constant 0 : index
    %c0_0 = arith.constant 0 : index
    %0 = vector.load %arg1[%c0, %c0_0] : memref<2x1024xf32, #tpu.memory_space<vmem>>, vector<2x1024xf32>
    %cst = arith.constant 6.100000e+01 : f32
    %1 = vector.broadcast %cst : f32 to vector<2x1024xf32>
    %2 = arith.mulf %0, %1 : vector<2x1024xf32>
    %cst_1 = arith.constant -0.000000e+00 : f32
    %3 = vector.broadcast %cst_1 : f32 to vector<2x1024xf32>
    %4 = arith.addf %2, %3 : vector<2x1024xf32>
    %5 = math.ceil %4 : vector<2x1024xf32>
    %cst_2 = arith.constant 0.000000e+00 : f32
    %cst_3 = arith.constant 6.200000e+01 : f32
    %6 = vector.broadcast %cst_2 : f32 to vector<2x1024xf32>
    %7 = arith.maximumf %6, %5 : vector<2x1024xf32>
    %8 = vector.broadcast %cst_3 : f32 to vector<2x1024xf32>
    %9 = arith.minimumf %8, %7 : vector<2x1024xf32>
    %cst_4 = arith.constant 0.0163934417 : f32
    %10 = vector.broadcast %cst_4 : f32 to vector<2x1024xf32>
    %11 = arith.mulf %9, %10 : vector<2x1024xf32>
    %cst_5 = arith.constant -0.00819672085 : f32
    %12 = vector.broadcast %cst_5 : f32 to vector<2x1024xf32>
    %13 = arith.addf %12, %11 : vector<2x1024xf32>
    %cst_6 = arith.constant 0.000000e+00 : f32
    %cst_7 = arith.constant 1.000000e+00 : f32
    %14 = vector.broadcast %cst_6 : f32 to vector<2x1024xf32>
    %15 = arith.maximumf %14, %13 : vector<2x1024xf32>
    %16 = vector.broadcast %cst_7 : f32 to vector<2x1024xf32>
    %17 = arith.minimumf %16, %15 : vector<2x1024xf32>
    %c0_8 = arith.constant 0 : index
    %c0_9 = arith.constant 0 : index
    %18 = vector.load %arg2[%c0_8, %c0_9] : memref<2x1024xf32, #tpu.memory_space<vmem>>, vector<2x1024xf32>
    tpu.vector_store %arg2[%c0_8, %c0_9], %17 {strides = array<i32>} : memref<2x1024xf32, #tpu.memory_space<vmem>>, vector<2x1024xf32>,
    return
  }
  func.func @transform_0(%arg0: i32) -> (i32, i32) {
    %c0_i32 = arith.constant 0 : i32
    %c0_i32_0 = arith.constant 0 : i32
    return %arg0, %c0_i32 : i32, i32
  }
  func.func @transform_1(%arg0: i32) -> (i32, i32) {
    %c0_i32 = arith.constant 0 : i32
    %c0_i32_0 = arith.constant 0 : i32
    return %arg0, %c0_i32 : i32, i32
  }
}

</mosaic_0001>

<llo_original>
// kernel: tpu_custom_call.1
$region0: #{tpu_custom_call.1}
  #allocation0 [shape = 'u32[]', space=smem, size = 0x4, offset = 0x4, fixed_abs, tag = 'smem constant byte address 0x4 - core index']
  #allocation1 [shape = 'u32[144,128]{1,0:T(1,128)}', space=vmem, size = 0x12000, scoped, tag = 'internal scratch']
  %s0 = inlined_call_operand.hbm [shape: f32[2,1024], index: 0, kind: input, shape index: {}]
  %s1 = inlined_call_operand.hbm [shape: f32[2,1024], index: 1, kind: output, shape index: {}]
  %s2 = sld [smem:[#allocation0]]
  $region18: #{tpu_custom_call.1} parent=0
    _
  %s4 = ssub.s32 1, %s2
  %s5 = scalar_select 0, %s4, %s2
  $region1: #{tpu_custom_call.1} parent=0
    #allocation2 [shape = 'u8[8192]{0}', space=vmem, size = 0x2000, scoped, tag = 'input window, operand 0, single buffered']
    #allocation3 [shape = 's32[1]{0}', space=sflag, size = 0x4, scoped, tag = 'scoped memory for tpu_custom_call.1']
    #allocation4 [shape = 's32[1]{0}', space=sflag, size = 0x4, scoped, tag = 'scoped memory for tpu_custom_call.1']
    #allocation5 [shape = 'u8[8192]{0}', space=vmem, size = 0x2000, scoped, tag = 'output window, operand 0, single buffered']
    %6 = vsyncpa [#allocation3], 0
    %7 = vsyncpa [#allocation4], 0
    // Predicated region
    $region2: #{tpu_custom_call.1} parent=1 // pred_check
      _
    $region3: #{tpu_custom_call.1} parent=1 // pred_check_branch
      %9 = sbr.rel (0) target = $region5
    $region4: #{tpu_custom_call.1} parent=1 // pred_region
      %s11 = ssub.s32 256, 256
      %12 = vsyncadd [#allocation3], %s11
      %s14 = sshll.u32 [#allocation2], 4
      %s15 = int_to_ptr.vmem [resolvable:$true] %s14
      %17 = dma.hbm_to_vmem [thread:$0]  %s0, 256, %s15, [#allocation3]
    $region5: #{tpu_custom_call.1} parent=1 // pred_fallthru
      _
    // Predicated region
    $region6: #{tpu_custom_call.1} parent=1 // pred_check
      _
    $region7: #{tpu_custom_call.1} parent=1 // pred_check_branch
      %19 = sbr.rel (0) target = $region9
    $region8: #{tpu_custom_call.1} parent=1 // pred_region
      %20 = dma.done [#allocation3], 256
    $region9: #{tpu_custom_call.1} parent=1 // pred_fallthru
      _
    %v21 = vld [vmem:[#allocation2] sm:$0xff]
    %v22 = vld [vmem:[#allocation2 + $0x8] sm:$0xff]
    %v23 = vmul.f32 %v21, 61.0
    %v24 = vmul.f32 %v22, 61.0
    %v25 = vceil.f32 %v23
    %v26 = vceil.f32 %v24
    %v27 = vmax.f32 %v25, 0.0
    %v28 = vmax.f32 %v26, 0.0
    %v29 = vmin.f32 %v27, 62.0
    %v30 = vmin.f32 %v28, 62.0
    %v31 = vmul.f32 %v29, 0.016393442
    %v32 = vmul.f32 %v30, 0.016393442
    %v33 = vadd.f32 %v31, -0.008196721
    %v34 = vadd.f32 %v32, -0.008196721
    %v35 = vmax.f32 %v33, 0.0
    %v36 = vmax.f32 %v34, 0.0
    %v37 = vmin.f32 %v35, 1.0
    %v38 = vmin.f32 %v36, 1.0
    %39 = vst [vmem:[#allocation5] sm:$0xff] %v37
    %40 = vst [vmem:[#allocation5 + $0x8] sm:$0xff] %v38
    // Predicated region
    $region10: #{tpu_custom_call.1} parent=1 // pred_check
      _
    $region11: #{tpu_custom_call.1} parent=1 // pred_check_branch
      %42 = sbr.rel (0) target = $region13
    $region12: #{tpu_custom_call.1} parent=1 // pred_region
      %s44 = ssub.s32 256, 256
      %45 = vsyncadd [#allocation4], %s44
      %s47 = sshll.u32 [#allocation5], 4
      %s48 = int_to_ptr.vmem [resolvable:$true] %s47
      %50 = dma.vmem_to_hbm [thread:$0]  %s48, 256, %s1, [#allocation4]
    $region13: #{tpu_custom_call.1} parent=1 // pred_fallthru
      _
    // Predicated region
    $region14: #{tpu_custom_call.1} parent=1 // pred_check
      _
    $region15: #{tpu_custom_call.1} parent=1 // pred_check_branch
      %52 = sbr.rel (0) target = $region17
    $region16: #{tpu_custom_call.1} parent=1 // pred_region
      %53 = dma.done [#allocation4], 256
    $region17: #{tpu_custom_call.1} parent=1 // pred_fallthru
      _
    %54 = vsyncpa [#allocation3], 1
    %55 = vsyncpa [#allocation4], 1

</llo_original>
